<compile_context>
chip_gen: v5e
topology: v5e:2x2
jax: 0.10.0
libtpu: 0.0.40
codegen_flags: <defaults>
</compile_context>

<pallas_src>
import jax
import jax.numpy as jnp
from jax.experimental import pallas as pl
from jax.experimental.pallas import tpu as pltpu


# ----------------------------- configuration -------------------------------
INPUT_WIDTHS = (3, 5, 8)      # inputwidth_list
FEATURES = sum(INPUT_WIDTHS)  # 16
N_LAYERS = 3
N_HIDDEN = 32
ENC = 1
OUTWIDTH = 4
BATCH = 16

TB_CAP = 4096                 # max rows per grid step (multiple of 8)

# ----- packed weight-slab layout: every block is (R, 32), row offsets are ---
# ----- multiples of 8 sublanes, no column sub-slicing in the kernel ---------
W_IN_R0 = 0     # (16, 32): block-diagonal per-slice input weights in cols 0:3
W0_R0 = 16      # (32, 32): Linear(3 -> 32) in rows 0:3, rows 3:32 zero
W1_R0 = 48      # (32, 32): Linear(32 -> 32)
W2_R0 = 80      # (32, 32): Linear(32 -> 16) in cols 0:16, cols 16:32 zero
W3_R0 = 112     # (32, 32): Linear(16 -> 32) in rows 0:16, rows 16:32 zero
WO_R0 = 144     # (32, 32): Linear(32 -> 4) in cols 0:4, cols 4:32 zero
BO_R0 = 176     # row 176: output bias in cols 0:4, cols 4:32 zero
SLAB_ROWS = 184
SLAB_COLS = 32


# ------------------------------- kernel ------------------------------------
def custom_net_kernel(x_ref, w_ref, o_ref):
    """Whole forward pass for one batch tile; all weights in one VMEM slab."""
    f32 = jnp.float32
    w_dt = w_ref.dtype           # f32 (exact) or bf16 (fast path)

    def layer(h, r0, relu=True):
        w = w_ref[r0:r0 + 32, :]                                   # (32, 32)
        y = jnp.dot(h.astype(w_dt), w, preferred_element_type=f32)
        return jnp.maximum(y, 0.0) if relu else y

    x = x_ref[...]                                                 # (tb, 16)
    # fused per-slice input layers (block-diagonal (16,32) weight) + ReLU
    h = jnp.maximum(
        jnp.dot(x.astype(w_dt), w_ref[W_IN_R0:W_IN_R0 + 16, :],
                preferred_element_type=f32), 0.0)                  # (tb, 32)
    # hidden stack with ReLU (zero-padded rows/cols give exact-0 contribs)
    h = layer(h, W0_R0)                                            # (tb, 32)
    h = layer(h, W1_R0)                                            # (tb, 32)
    h = layer(h, W2_R0)                                            # (tb, 32) cols 16: zero
    h = layer(h, W3_R0)                                            # (tb, 32)
    # output layer: linear + bias, no activation (cols 4:32 are exactly zero)
    out = layer(h, WO_R0, relu=False) \
        + w_ref[BO_R0:BO_R0 + 1, :].astype(f32)                    # (tb, 32)
    o_ref[...] = out.astype(o_ref.dtype)


# ------------------------------- wrapper ------------------------------------
def _round_up(n, m):
    return ((n + m - 1) // m) * m


def _detect_num_tensorcores():
    """Best-effort TC count (2 on v7x-style multi-core devices, else 1)."""
    try:
        return max(1, int(getattr(jax.devices()[0], "num_cores", 1) or 1))
    except Exception:
        return 1


def custom_net_forward(x, w_slab, *, tb=None, num_cores=None, use_bf16=False):
    """Pallas wrapper.

    One big tile (single grid step) for small batches; large batches tile at
    up to TB_CAP rows and, on multi-TensorCore chips, keep a grid length that
    is a multiple of the core count so the parallel axis is sharded.
    """
    B, F = x.shape
    assert F == FEATURES
    assert w_slab.shape == (SLAB_ROWS, SLAB_COLS)

    if num_cores is None:
        num_cores = _detect_num_tensorcores()

    if tb is None:
        steps = pl.cdiv(B, TB_CAP)
        if num_cores > 1 and B > 8 * num_cores:
            steps = _round_up(steps, num_cores)       # shard across TCs (v7x)
        tb = _round_up(pl.cdiv(B, steps), 8)
    assert tb % 8 == 0

    grid_n = pl.cdiv(B, tb)
    b_pad = grid_n * tb
    if b_pad != B:
        x = jnp.pad(x, ((0, b_pad - B), (0, 0)))      # ragged batch: zero-pad

    if use_bf16:
        # cast ONCE in the wrapper (not per-layer in-kernel); accumulation
        # stays f32 via preferred_element_type.
        w_slab = w_slab.astype(jnp.bfloat16)

    # Advisory cost so XLA can overlap this launch-bound call at small B.
    flops = 2 * b_pad * (FEATURES * SLAB_COLS + 5 * SLAB_COLS * SLAB_COLS)
    bytes_accessed = (x.size * x.dtype.itemsize
                      + w_slab.size * w_slab.dtype.itemsize
                      + b_pad * SLAB_COLS * 4)

    out = pl.pallas_call(
        custom_net_kernel,
        out_shape=jax.ShapeDtypeStruct((b_pad, SLAB_COLS), jnp.float32),
        grid_spec=pltpu.PrefetchScalarGridSpec(
            num_scalar_prefetch=0,
            grid=(grid_n,),
            in_specs=[
                pl.BlockSpec((tb, FEATURES), lambda i: (i, 0)),          # x
                pl.BlockSpec((SLAB_ROWS, SLAB_COLS), lambda i: (0, 0)),  # slab
            ],
            out_specs=pl.BlockSpec((tb, SLAB_COLS), lambda i: (i, 0)),
        ),
        compiler_params=pltpu.CompilerParams(
            dimension_semantics=("parallel",)),
        cost_estimate=pl.CostEstimate(
            flops=flops, transcendentals=0, bytes_accessed=bytes_accessed),
    )(x, w_slab)

    return out[:B, :OUTWIDTH]


# ------------------------- parameter construction --------------------------
def _uniform(key, shape, fan_in):
    bound = 1.0 / jnp.sqrt(jnp.float32(fan_in))
    return jax.random.uniform(key, shape, jnp.float32, -bound, bound)


def build_params(key):
    """Deterministic synthetic parameters (PyTorch-Linear-style uniform init)."""
    keys = jax.random.split(key, 4 + len(INPUT_WIDTHS) + (N_LAYERS + 1))
    k_iter = iter(keys)

    # per-slice input layers: Linear(width_i -> 1, bias=False); weight (1, w_i)
    input_ws = [_uniform(next(k_iter), (1, w), w) for w in INPUT_WIDTHS]

    # hidden stack layer shapes, reproducing the enc bottleneck logic
    iwidth = len(INPUT_WIDTHS)                      # scalewidth == 'singular'
    layer_dims = [(iwidth, N_HIDDEN)]
    for i in range(N_LAYERS):
        inp, op = N_HIDDEN, N_HIDDEN
        if ENC:
            if i == ENC:
                op = N_HIDDEN // 2
            elif i == ENC + 1:
                inp = N_HIDDEN // 2
        layer_dims.append((inp, op))
    # torch stores (out, in); we build transposed (in, out) directly
    layer_wts = [_uniform(next(k_iter), (inp, op), inp) for inp, op in layer_dims]

    # output layer Linear(op -> OUTWIDTH) with bias (default)
    last_op = layer_dims[-1][1]
    wo_t = _uniform(next(k_iter), (last_op, OUTWIDTH), last_op)
    bo = _uniform(next(k_iter), (1, OUTWIDTH), last_op)

    return input_ws, layer_wts, wo_t, bo


def pack_weight_slab(input_ws, layer_wts, wo_t, bo):
    """Pack all weights into one zero-padded (SLAB_ROWS, SLAB_COLS) f32 slab."""
    slab = jnp.zeros((SLAB_ROWS, SLAB_COLS), jnp.float32)

    # fused block-diagonal input weight (16, 3) into rows 0:16, cols 0:3
    beg = 0
    for i, w in enumerate(INPUT_WIDTHS):
        slab = slab.at[W_IN_R0 + beg:W_IN_R0 + beg + w, i].set(input_ws[i][0])
        beg += w

    # hidden-stack weights at 8-aligned row offsets, zero-padded to 32x32
    offsets = (W0_R0, W1_R0, W2_R0, W3_R0)
    for off, wt in zip(offsets, layer_wts):
        r, c = wt.shape
        slab = slab.at[off:off + r, 0:c].set(wt)

    # output weight + bias (cols 4:32 stay zero)
    slab = slab.at[WO_R0:WO_R0 + wo_t.shape[0], 0:OUTWIDTH].set(wo_t)
    slab = slab.at[BO_R0:BO_R0 + 1, 0:OUTWIDTH].set(bo)
    return slab


# ------------------------------ JAX reference -------------------------------
def reference_forward(x, input_ws, layer_wts, wo_t, bo):
    """Literal translation of Custom_Net.forward for correctness checking."""
    parts, beg = [], 0
    for i, w in enumerate(INPUT_WIDTHS):
        slic = x[:, beg:beg + w]
        beg += w
        parts.append(jax.nn.relu(slic @ input_ws[i].T))
    h = jnp.concatenate(parts, axis=-1)
    for wt in layer_wts:
        h = jax.nn.relu(h @ wt)
    return h @ wo_t + bo


# --------------------------------- main -------------------------------------
if __name__ == "__main__":
    key = jax.random.PRNGKey(0)
    k_x, k_p, k_x2 = jax.random.split(key, 3)

    input_ws, layer_wts, wo_t, bo = build_params(k_p)
    w_slab = pack_weight_slab(input_ws, layer_wts, wo_t, bo)

    # primary check: small batch (single grid step)
    x = jax.random.normal(k_x, (BATCH, FEATURES), jnp.float32)
    out = jax.block_until_ready(custom_net_forward(x, w_slab))
    ref = reference_forward(x, input_ws, layer_wts, wo_t, bo)
    assert out.shape == (BATCH, OUTWIDTH)
    assert jnp.allclose(out, ref, atol=1e-5, rtol=1e-5)

    # secondary check: ragged batch (exercises padding + slicing path)
    x2 = jax.random.normal(k_x2, (100, FEATURES), jnp.float32)
    out2 = jax.block_until_ready(custom_net_forward(x2, w_slab, tb=64))
    ref2 = reference_forward(x2, input_ws, layer_wts, wo_t, bo)
    assert out2.shape == (100, OUTWIDTH)
    assert jnp.allclose(out2, ref2, atol=1e-5, rtol=1e-5)

    print("KERNEL_OK")
</pallas_src>

<mosaic_0001>
module attributes {stable_mosaic.version = 11 : i64} {
  func.func @custom_net_kernel(%arg0: i32, %arg1: memref<16x16xf32, #tpu.memory_space<vmem>>, %arg2: memref<184x32xf32, #tpu.memory_space<vmem>>, %arg3: memref<16x32xf32, #tpu.memory_space<vmem>>) attributes {dimension_semantics = [#tpu.dimension_semantics<parallel>], iteration_bounds = array<i64: 1>, scalar_prefetch = 0 : i64, scratch_operands = 0 : i64, tpu.core_type = #tpu.core_type<tc>, window_params = [{transform_indices = @transform_0, window_bounds = array<i64: 16, 16>}, {pipeline_mode = #tpu.pipeline_mode<synchronous>, transform_indices = @transform_1, window_bounds = array<i64: 184, 32>}, {transform_indices = @transform_2, window_bounds = array<i64: 16, 32>}]} {
    %c0 = arith.constant 0 : index
    %c0_0 = arith.constant 0 : index
    %0 = vector.load %arg1[%c0, %c0_0] : memref<16x16xf32, #tpu.memory_space<vmem>>, vector<16x16xf32>
    %c0_1 = arith.constant 0 : index
    %c0_2 = arith.constant 0 : index
    %1 = vector.load %arg2[%c0_1, %c0_2] : memref<184x32xf32, #tpu.memory_space<vmem>>, vector<16x32xf32>
    %cst = arith.constant dense<0.000000e+00> : vector<16x32xf32>
    %2 = tpu.matmul %0, %1, %cst {dimension_numbers = #tpu.dot_dimension_numbers<[1], [0], [0], [1], [0, 0, 1, 1], [], []>} : vector<16x16xf32>, vector<16x32xf32>, vector<16x32xf32> -> vector<16x32xf32>
    %cst_3 = arith.constant 0.000000e+00 : f32
    %3 = vector.broadcast %cst_3 : f32 to vector<16x32xf32>
    %4 = arith.maximumf %2, %3 : vector<16x32xf32>
    %c16 = arith.constant 16 : index
    %c0_4 = arith.constant 0 : index
    %5 = vector.load %arg2[%c16, %c0_4] : memref<184x32xf32, #tpu.memory_space<vmem>>, vector<32x32xf32>
    %cst_5 = arith.constant dense<0.000000e+00> : vector<16x32xf32>
    %6 = tpu.matmul %4, %5, %cst_5 {dimension_numbers = #tpu.dot_dimension_numbers<[1], [0], [0], [1], [0, 0, 1, 1], [], []>} : vector<16x32xf32>, vector<32x32xf32>, vector<16x32xf32> -> vector<16x32xf32>
    %cst_6 = arith.constant 0.000000e+00 : f32
    %7 = vector.broadcast %cst_6 : f32 to vector<16x32xf32>
    %8 = arith.maximumf %6, %7 : vector<16x32xf32>
    %c48 = arith.constant 48 : index
    %c0_7 = arith.constant 0 : index
    %9 = vector.load %arg2[%c48, %c0_7] : memref<184x32xf32, #tpu.memory_space<vmem>>, vector<32x32xf32>
    %cst_8 = arith.constant dense<0.000000e+00> : vector<16x32xf32>
    %10 = tpu.matmul %8, %9, %cst_8 {dimension_numbers = #tpu.dot_dimension_numbers<[1], [0], [0], [1], [0, 0, 1, 1], [], []>} : vector<16x32xf32>, vector<32x32xf32>, vector<16x32xf32> -> vector<16x32xf32>
    %cst_9 = arith.constant 0.000000e+00 : f32
    %11 = vector.broadcast %cst_9 : f32 to vector<16x32xf32>
    %12 = arith.maximumf %10, %11 : vector<16x32xf32>
    %c80 = arith.constant 80 : index
    %c0_10 = arith.constant 0 : index
    %13 = vector.load %arg2[%c80, %c0_10] : memref<184x32xf32, #tpu.memory_space<vmem>>, vector<32x32xf32>
    %cst_11 = arith.constant dense<0.000000e+00> : vector<16x32xf32>
    %14 = tpu.matmul %12, %13, %cst_11 {dimension_numbers = #tpu.dot_dimension_numbers<[1], [0], [0], [1], [0, 0, 1, 1], [], []>} : vector<16x32xf32>, vector<32x32xf32>, vector<16x32xf32> -> vector<16x32xf32>
    %cst_12 = arith.constant 0.000000e+00 : f32
    %15 = vector.broadcast %cst_12 : f32 to vector<16x32xf32>
    %16 = arith.maximumf %14, %15 : vector<16x32xf32>
    %c112 = arith.constant 112 : index
    %c0_13 = arith.constant 0 : index
    %17 = vector.load %arg2[%c112, %c0_13] : memref<184x32xf32, #tpu.memory_space<vmem>>, vector<32x32xf32>
    %cst_14 = arith.constant dense<0.000000e+00> : vector<16x32xf32>
    %18 = tpu.matmul %16, %17, %cst_14 {dimension_numbers = #tpu.dot_dimension_numbers<[1], [0], [0], [1], [0, 0, 1, 1], [], []>} : vector<16x32xf32>, vector<32x32xf32>, vector<16x32xf32> -> vector<16x32xf32>
    %cst_15 = arith.constant 0.000000e+00 : f32
    %19 = vector.broadcast %cst_15 : f32 to vector<16x32xf32>
    %20 = arith.maximumf %18, %19 : vector<16x32xf32>
    %c144 = arith.constant 144 : index
    %c0_16 = arith.constant 0 : index
    %21 = vector.load %arg2[%c144, %c0_16] : memref<184x32xf32, #tpu.memory_space<vmem>>, vector<32x32xf32>
    %cst_17 = arith.constant dense<0.000000e+00> : vector<16x32xf32>
    %22 = tpu.matmul %20, %21, %cst_17 {dimension_numbers = #tpu.dot_dimension_numbers<[1], [0], [0], [1], [0, 0, 1, 1], [], []>} : vector<16x32xf32>, vector<32x32xf32>, vector<16x32xf32> -> vector<16x32xf32>
    %c176 = arith.constant 176 : index
    %c0_18 = arith.constant 0 : index
    %23 = vector.load %arg2[%c176, %c0_18] : memref<184x32xf32, #tpu.memory_space<vmem>>, vector<1x32xf32>
    %24 = vector.broadcast %23 : vector<1x32xf32> to vector<16x32xf32>
    %25 = arith.addf %22, %24 : vector<16x32xf32>
    %c0_19 = arith.constant 0 : index
    %c0_20 = arith.constant 0 : index
    %26 = vector.load %arg3[%c0_19, %c0_20] : memref<16x32xf32, #tpu.memory_space<vmem>>, vector<16x32xf32>
    tpu.vector_store %arg3[%c0_19, %c0_20], %25 {strides = array<i32>} : memref<16x32xf32, #tpu.memory_space<vmem>>, vector<16x32xf32>,
    return
  }
  func.func @transform_0(%arg0: i32) -> (i32, i32) {
    %c0_i32 = arith.constant 0 : i32
    %c0_i32_0 = arith.constant 0 : i32
    return %arg0, %c0_i32 : i32, i32
  }
  func.func @transform_1(%arg0: i32) -> (i32, i32) {
    %c0_i32 = arith.constant 0 : i32
    %c0_i32_0 = arith.constant 0 : i32
    %c0_i32_1 = arith.constant 0 : i32
    return %c0_i32, %c0_i32_0 : i32, i32
  }
  func.func @transform_2(%arg0: i32) -> (i32, i32) {
    %c0_i32 = arith.constant 0 : i32
    %c0_i32_0 = arith.constant 0 : i32
    return %arg0, %c0_i32 : i32, i32
  }
}

</mosaic_0001>

<llo_original>
// kernel: tpu_custom_call.1
$region0: #{tpu_custom_call.1}
  #allocation0 [shape = 'u32[]', space=smem, size = 0x4, offset = 0x4, fixed_abs, tag = 'smem constant byte address 0x4 - core index']
  #allocation1 [shape = 'u32[72,128]{1,0:T(1,128)}', space=vmem, size = 0x9000, scoped, tag = 'internal scratch']
  %s0 = inlined_call_operand.vmem [shape: f32[16,16], index: 0, kind: input, shape index: {}]
  %s1 = inlined_call_operand.vmem [shape: f32[184,32], index: 1, kind: input, shape index: {}]
  %s2 = inlined_call_operand.hbm [shape: f32[16,32], index: 2, kind: output, shape index: {}]
  %s3 = sld [smem:[#allocation0]]
  $region18: #{tpu_custom_call.1} parent=0
    _
  %s5 = ssub.s32 1, %s3
  %s6 = scalar_select 0, %s5, %s3
  $region1: #{tpu_custom_call.1} parent=0
    #allocation2 [shape = 'u8[8192]{0}', space=vmem, size = 0x2000, scoped, tag = 'output window, operand 0, single buffered']
    #allocation3 [shape = 's32[1]{0}', space=sflag, size = 0x4, scoped, tag = 'scoped memory for tpu_custom_call.1']
    %7 = vsyncpa [#allocation3], 0
    // Predicated region
    $region2: #{tpu_custom_call.1} parent=1 // pred_check
      _
    $region3: #{tpu_custom_call.1} parent=1 // pred_check_branch
      %9 = sbr.rel (0) target = $region5
    $region4: #{tpu_custom_call.1} parent=1 // pred_region
      _
    $region5: #{tpu_custom_call.1} parent=1 // pred_fallthru
      _
    // Predicated region
    $region6: #{tpu_custom_call.1} parent=1 // pred_check
      _
    $region7: #{tpu_custom_call.1} parent=1 // pred_check_branch
      %11 = sbr.rel (0) target = $region9
    $region8: #{tpu_custom_call.1} parent=1 // pred_region
      _
    $region9: #{tpu_custom_call.1} parent=1 // pred_fallthru
      _
    %v12 = vld [vmem:[%s0] sm:$0xff]
    %v13 = vld [vmem:[%s0 + $0x8] sm:$0xff]
    %v14 = vld [vmem:[%s1] sm:$0xff]
    %v15 = vld [vmem:[%s1 + $0x8] sm:$0xff]
    %vm16 = vcmask 130048
    %v18 = vsel %vm16, %v12, 0
    %v21 = vsel %vm16, %v13, 0
    %23 = vmatpush.msra.mxu0 0.0
    %24 = vmatpush.msra.mxu0 0.0
    %25 = vmatpush.msra.mxu0 0.0
    %26 = vmatpush.msra.mxu0 0.0
    %27 = vmatpush.msra.mxu0 0.0
    %28 = vmatpush.msra.mxu0 0.0
    %29 = vmatpush.msra.mxu0 0.0
    %30 = vmatpush.msra.mxu0 0.0
    %31 = vmatpush.msra.mxu0 0.0
    %32 = vmatpush.msra.mxu0 0.0
    %33 = vmatpush.msra.mxu0 0.0
    %34 = vmatpush.msra.mxu0 0.0
    %35 = vmatpush.msra.mxu0 0.0
    %36 = vmatpush.msra.mxu0 0.0
    %37 = vmatpush.msra.mxu0 %v15
    %38 = vmatpush.msra.mxu0 %v14
    %39 = vmatmul.f32.gmra.mxu0 %v18
    %v40 = vpop.f32.mrf.mxu0
    %v41 = vadd.f32 0.0, %v40
    %42 = vmatmul.f32.gmra.mxu0 %v21
    %v43 = vpop.f32.mrf.mxu0
    %v44 = vadd.f32 0.0, %v43
    %45 = vdwg.mxu0
    %v46 = vmax.f32 %v41, 0.0
    %v47 = vmax.f32 %v44, 0.0
    %v48 = vld [vmem:[%s1 + $0x10] sm:$0xff]
    %v49 = vld [vmem:[%s1 + $0x18] sm:$0xff]
    %v50 = vld [vmem:[%s1 + $0x20] sm:$0xff]
    %v51 = vld [vmem:[%s1 + $0x28] sm:$0xff]
    %vm52 = vcmask 261120
    %v54 = vsel %vm52, %v46, 0
    %v57 = vsel %vm52, %v47, 0
    %59 = vmatpush.msra.mxu0 0.0
    %60 = vmatpush.msra.mxu0 0.0
    %61 = vmatpush.msra.mxu0 0.0
    %62 = vmatpush.msra.mxu0 0.0
    %63 = vmatpush.msra.mxu0 0.0
    %64 = vmatpush.msra.mxu0 0.0
    %65 = vmatpush.msra.mxu0 0.0
    %66 = vmatpush.msra.mxu0 0.0
    %67 = vmatpush.msra.mxu0 0.0
    %68 = vmatpush.msra.mxu0 0.0
    %69 = vmatpush.msra.mxu0 0.0
    %70 = vmatpush.msra.mxu0 0.0
    %71 = vmatpush.msra.mxu0 %v51
    %72 = vmatpush.msra.mxu0 %v50
    %73 = vmatpush.msra.mxu0 %v49
    %74 = vmatpush.msra.mxu0 %v48
    %75 = vmatmul.f32.gmra.mxu0 %v54
    %v76 = vpop.f32.mrf.mxu0
    %v77 = vadd.f32 0.0, %v76
    %78 = vmatmul.f32.gmra.mxu0 %v57
    %v79 = vpop.f32.mrf.mxu0
    %v80 = vadd.f32 0.0, %v79
    %81 = vdwg.mxu0
    %v82 = vmax.f32 %v77, 0.0
    %v83 = vmax.f32 %v80, 0.0
    %v84 = vld [vmem:[%s1 + $0x30] sm:$0xff]
    %v85 = vld [vmem:[%s1 + $0x38] sm:$0xff]
    %v86 = vld [vmem:[%s1 + $0x40] sm:$0xff]
    %v87 = vld [vmem:[%s1 + $0x48] sm:$0xff]
    %v89 = vsel %vm52, %v82, 0
    %v92 = vsel %vm52, %v83, 0
    %94 = vmatpush.msra.mxu0 0.0
    %95 = vmatpush.msra.mxu0 0.0
    %96 = vmatpush.msra.mxu0 0.0
    %97 = vmatpush.msra.mxu0 0.0
    %98 = vmatpush.msra.mxu0 0.0
    %99 = vmatpush.msra.mxu0 0.0
    %100 = vmatpush.msra.mxu0 0.0
    %101 = vmatpush.msra.mxu0 0.0
    %102 = vmatpush.msra.mxu0 0.0
    %103 = vmatpush.msra.mxu0 0.0
    %104 = vmatpush.msra.mxu0 0.0
    %105 = vmatpush.msra.mxu0 0.0
    %106 = vmatpush.msra.mxu0 %v87
    %107 = vmatpush.msra.mxu0 %v86
    %108 = vmatpush.msra.mxu0 %v85
    %109 = vmatpush.msra.mxu0 %v84
    %110 = vmatmul.f32.gmra.mxu0 %v89
    %v111 = vpop.f32.mrf.mxu0
    %v112 = vadd.f32 0.0, %v111
    %113 = vmatmul.f32.gmra.mxu0 %v92
    %v114 = vpop.f32.mrf.mxu0
    %v115 = vadd.f32 0.0, %v114
    %116 = vdwg.mxu0
    %v117 = vmax.f32 %v112, 0.0
    %v118 = vmax.f32 %v115, 0.0
    %v119 = vld [vmem:[%s1 + $0x50] sm:$0xff]
    %v120 = vld [vmem:[%s1 + $0x58] sm:$0xff]
    %v121 = vld [vmem:[%s1 + $0x60] sm:$0xff]
    %v122 = vld [vmem:[%s1 + $0x68] sm:$0xff]
    %v124 = vsel %vm52, %v117, 0
    %v127 = vsel %vm52, %v118, 0
    %129 = vmatpush.msra.mxu0 0.0
    %130 = vmatpush.msra.mxu0 0.0
    %131 = vmatpush.msra.mxu0 0.0
    %132 = vmatpush.msra.mxu0 0.0
    %133 = vmatpush.msra.mxu0 0.0
    %134 = vmatpush.msra.mxu0 0.0
    %135 = vmatpush.msra.mxu0 0.0
    %136 = vmatpush.msra.mxu0 0.0
    %137 = vmatpush.msra.mxu0 0.0
    %138 = vmatpush.msra.mxu0 0.0
    %139 = vmatpush.msra.mxu0 0.0
    %140 = vmatpush.msra.mxu0 0.0
    %141 = vmatpush.msra.mxu0 %v122
    %142 = vmatpush.msra.mxu0 %v121
    %143 = vmatpush.msra.mxu0 %v120
    %144 = vmatpush.msra.mxu0 %v119
    %145 = vmatmul.f32.gmra.mxu0 %v124
    %v146 = vpop.f32.mrf.mxu0
    %v147 = vadd.f32 0.0, %v146
    %148 = vmatmul.f32.gmra.mxu0 %v127
    %v149 = vpop.f32.mrf.mxu0
    %v150 = vadd.f32 0.0, %v149
    %151 = vdwg.mxu0
    %v152 = vmax.f32 %v147, 0.0
    %v153 = vmax.f32 %v150, 0.0
    %v154 = vld [vmem:[%s1 + $0x70] sm:$0xff]
    %v155 = vld [vmem:[%s1 + $0x78] sm:$0xff]
    %v156 = vld [vmem:[%s1 + $0x80] sm:$0xff]
    %v157 = vld [vmem:[%s1 + $0x88] sm:$0xff]
    %v159 = vsel %vm52, %v152, 0
    %v162 = vsel %vm52, %v153, 0
    %164 = vmatpush.msra.mxu0 0.0
    %165 = vmatpush.msra.mxu0 0.0
    %166 = vmatpush.msra.mxu0 0.0
    %167 = vmatpush.msra.mxu0 0.0
    %168 = vmatpush.msra.mxu0 0.0
    %169 = vmatpush.msra.mxu0 0.0
    %170 = vmatpush.msra.mxu0 0.0
    %171 = vmatpush.msra.mxu0 0.0
    %172 = vmatpush.msra.mxu0 0.0
    %173 = vmatpush.msra.mxu0 0.0
    %174 = vmatpush.msra.mxu0 0.0
    %175 = vmatpush.msra.mxu0 0.0
    %176 = vmatpush.msra.mxu0 %v157
    %177 = vmatpush.msra.mxu0 %v156
    %178 = vmatpush.msra.mxu0 %v155
    %179 = vmatpush.msra.mxu0 %v154
    %180 = vmatmul.f32.gmra.mxu0 %v159
    %v181 = vpop.f32.mrf.mxu0
    %v182 = vadd.f32 0.0, %v181
    %183 = vmatmul.f32.gmra.mxu0 %v162
    %v184 = vpop.f32.mrf.mxu0
    %v185 = vadd.f32 0.0, %v184
    %186 = vdwg.mxu0
    %v187 = vmax.f32 %v182, 0.0
    %v188 = vmax.f32 %v185, 0.0
    %v189 = vld [vmem:[%s1 + $0x90] sm:$0xff]
    %v190 = vld [vmem:[%s1 + $0x98] sm:$0xff]
    %v191 = vld [vmem:[%s1 + $0xa0] sm:$0xff]
    %v192 = vld [vmem:[%s1 + $0xa8] sm:$0xff]
    %v193 = vld [vmem:[%s1 + $0xb0] sm:$0x1]
    %v194 = vperm.slane %v193, 0
    %v196 = vsel %vm52, %v187, 0
    %v199 = vsel %vm52, %v188, 0
    %201 = vmatpush.msra.mxu0 0.0
    %202 = vmatpush.msra.mxu0 0.0
    %203 = vmatpush.msra.mxu0 0.0
    %204 = vmatpush.msra.mxu0 0.0
    %205 = vmatpush.msra.mxu0 0.0
    %206 = vmatpush.msra.mxu0 0.0
    %207 = vmatpush.msra.mxu0 0.0
    %208 = vmatpush.msra.mxu0 0.0
    %209 = vmatpush.msra.mxu0 0.0
    %210 = vmatpush.msra.mxu0 0.0
    %211 = vmatpush.msra.mxu0 0.0
    %212 = vmatpush.msra.mxu0 0.0
    %213 = vmatpush.msra.mxu0 %v192
    %214 = vmatpush.msra.mxu0 %v191
    %215 = vmatpush.msra.mxu0 %v190
    %216 = vmatpush.msra.mxu0 %v189
    %217 = vmatmul.f32.gmra.mxu0 %v196
    %v218 = vpop.f32.mrf.mxu0
    %v219 = vadd.f32 %v194, %v218
    %220 = vmatmul.f32.gmra.mxu0 %v199
    %v221 = vpop.f32.mrf.mxu0
    %v222 = vadd.f32 %v194, %v221
    %223 = vdwg.mxu0
    %224 = vst.msk [vmem:[#allocation2] sm:$0xff] %vm52, %v219
    %225 = vst.msk [vmem:[#allocation2 + $0x8] sm:$0xff] %vm52, %v222
    // Predicated region
    $region10: #{tpu_custom_call.1} parent=1 // pred_check
      _
    $region11: #{tpu_custom_call.1} parent=1 // pred_check_branch
      %227 = sbr.rel (0) target = $region13
    $region12: #{tpu_custom_call.1} parent=1 // pred_region
      %229 = vsyncadd [#allocation3], 0
      %s230 = sshll.u32 [#allocation2], 4
      %s231 = int_to_ptr.vmem [resolvable:$true] %s230
      %s232 = sshll.u32 %s2, 4
      %s233 = int_to_ptr.hbm [resolvable:$true] %s232
      %238 = dma.vmem_to_hbm [thread:$0]  %s231, 256, %s233, [#allocation3], 128, 128, 8
    $region13: #{tpu_custom_call.1} parent=1 // pred_fallthru
      _
    // Predicated region
    $region14: #{tpu_custom_call.1} parent=1 // pred_check
      _
    $region15: #{tpu_custom_call.1} parent=1 // pred_check_branch
      %240 = sbr.rel (0) target = $region17
    $region16: #{tpu_custom_call.1} parent=1 // pred_region
      %242 = dma.done [#allocation3], 256
    $region17: #{tpu_custom_call.1} parent=1 // pred_fallthru
      _
    %243 = vsyncpa [#allocation3], 1

</llo_original>
